<compile_context>
chip_gen: v7x
topology: tpu7x:2x2x1
jax: 0.10.0
libtpu: 0.0.40
codegen_flags: <defaults>
</compile_context>

<pallas_src>
import functools

import jax
import jax.numpy as jnp
from jax.experimental import pallas as pl
from jax.experimental.pallas import tpu as pltpu

_LANES = 128
_SUBLANES = 8


def _bce_partial_sum_kernel(pred_ref, lab_ref, out_ref, *, n_valid, block_rows,
                            needs_mask):
    """Per-tile partial sum of numerically-stable BCE-with-logits.

    loss_elem = max(x, 0) - x*y + log1p(exp(-|x|))   (same formula as PyTorch)
    """
    i = pl.program_id(0)
    x = pred_ref[...].astype(jnp.float32)
    y = lab_ref[...].astype(jnp.float32)
    per_elem = jnp.maximum(x, 0.0) - x * y + jnp.log1p(jnp.exp(-jnp.abs(x)))

    if needs_mask:
        # Mask out padded elements (padding is zeros -> would add log(2) each).
        r = jax.lax.broadcasted_iota(jnp.int32, x.shape, 0)
        c = jax.lax.broadcasted_iota(jnp.int32, x.shape, 1)
        flat_idx = (i * block_rows + r) * _LANES + c
        per_elem = jnp.where(flat_idx < n_valid, per_elem, 0.0)

    out_ref[...] = jnp.sum(per_elem, axis=(0, 1), keepdims=True)


def au_loss(predictions, labels, *, block_rows=1024):
    """Pallas equivalent of AU_Loss.forward (BCEWithLogitsLoss, mean reduction)."""
    assert predictions.shape == labels.shape
    assert block_rows % _SUBLANES == 0
    n_valid = int(predictions.size)

    # Lane-dense layout: flatten to (rows, 128).
    x = predictions.reshape(-1)
    y = labels.reshape(-1)
    rows = pl.cdiv(n_valid, _LANES)
    if rows <= block_rows:
        # Single tile; round rows up to the sublane multiple (8).
        tr = max(_SUBLANES, ((rows + _SUBLANES - 1) // _SUBLANES) * _SUBLANES)
        rows_padded = tr
    else:
        tr = block_rows
        rows_padded = ((rows + tr - 1) // tr) * tr
    grid_r = rows_padded // tr

    pad = rows_padded * _LANES - n_valid
    if pad:
        x = jnp.pad(x, (0, pad))
        y = jnp.pad(y, (0, pad))
    x2 = x.reshape(rows_padded, _LANES)
    y2 = y.reshape(rows_padded, _LANES)

    bytes_in = x2.size * x2.dtype.itemsize + y2.size * y2.dtype.itemsize
    cost = pl.CostEstimate(
        flops=5 * rows_padded * _LANES,
        transcendentals=2 * rows_padded * _LANES,
        bytes_accessed=bytes_in + grid_r * 4,
    )

    partials = pl.pallas_call(
        functools.partial(
            _bce_partial_sum_kernel,
            n_valid=n_valid,
            block_rows=tr,
            needs_mask=bool(pad),
        ),
        out_shape=jax.ShapeDtypeStruct((grid_r, 1), jnp.float32),
        grid=(grid_r,),
        in_specs=[
            pl.BlockSpec((tr, _LANES), lambda i: (i, 0)),
            pl.BlockSpec((tr, _LANES), lambda i: (i, 0)),
        ],
        out_specs=pl.BlockSpec((1, 1), lambda i: (i, 0)),
        compiler_params=pltpu.CompilerParams(
            dimension_semantics=("parallel",),
        ),
        cost_estimate=cost,
    )(x2, y2)

    # Tiny final reduction + mean outside the kernel (fuses into the XLA graph);
    # per-tile partials keep f32 precision for large inputs.
    return jnp.sum(partials) * (1.0 / n_valid)


def _bce_ref(predictions, labels):
    x = predictions.astype(jnp.float32)
    y = labels.astype(jnp.float32)
    return jnp.mean(jnp.maximum(x, 0.0) - x * y + jnp.log1p(jnp.exp(-jnp.abs(x))))


if __name__ == "__main__":
    key = jax.random.PRNGKey(0)

    # Small shape implied by the module's dataset (7 action-unit classes).
    k1, k2, k3, k4 = jax.random.split(key, 4)
    B, NUM_CLASS = 8, 7
    predictions = jax.random.normal(k1, (B, NUM_CLASS), dtype=jnp.float32)
    labels = (jax.random.uniform(k2, (B, NUM_CLASS)) > 0.5).astype(jnp.float32)

    loss = jax.block_until_ready(au_loss(predictions, labels))
    ref = _bce_ref(predictions, labels)
    assert jnp.allclose(loss, ref, atol=1e-5, rtol=1e-5), (loss, ref)

    # Secondary check exercising a multi-tile grid + padding mask (still small):
    B2, C2 = 64, 33
    p2 = jax.random.normal(k3, (B2, C2), dtype=jnp.float32)
    l2 = (jax.random.uniform(k4, (B2, C2)) > 0.5).astype(jnp.float32)
    loss2 = jax.block_until_ready(au_loss(p2, l2, block_rows=8))
    ref2 = _bce_ref(p2, l2)
    assert jnp.allclose(loss2, ref2, atol=1e-5, rtol=1e-5), (loss2, ref2)

    # Exact-fit case (no padding -> masking statically elided in the kernel):
    B3, C3 = 16, 128
    p3 = jax.random.normal(k3, (B3, C3), dtype=jnp.float32)
    l3 = (jax.random.uniform(k4, (B3, C3)) > 0.5).astype(jnp.float32)
    loss3 = jax.block_until_ready(au_loss(p3, l3, block_rows=8))
    ref3 = _bce_ref(p3, l3)
    assert jnp.allclose(loss3, ref3, atol=1e-5, rtol=1e-5), (loss3, ref3)

    # TODO(synk): pos_weight variant (get_loss_weight reads a CSV) is not part
    # of forward() and is not implemented here.
    print("KERNEL_OK")
</pallas_src>

<mosaic_0001>
module attributes {stable_mosaic.version = 11 : i64} {
  func.func @_bce_partial_sum_kernel(%arg0: i32, %arg1: memref<8x128xf32, #tpu.memory_space<vmem>>, %arg2: memref<8x128xf32, #tpu.memory_space<vmem>>, %arg3: memref<1x1xf32, #tpu.memory_space<vmem>>) attributes {dimension_semantics = [#tpu.dimension_semantics<parallel>], iteration_bounds = array<i64: 1>, scalar_prefetch = 0 : i64, scratch_operands = 0 : i64, tpu.core_type = #tpu.core_type<tc>, window_params = [{transform_indices = @transform_0, window_bounds = array<i64: 8, 128>}, {transform_indices = @transform_1, window_bounds = array<i64: 8, 128>}, {transform_indices = @transform_2, window_bounds = array<i64: 1, 1>}]} {
    %c0 = arith.constant 0 : index
    %c0_0 = arith.constant 0 : index
    %0 = vector.load %arg1[%c0, %c0_0] : memref<8x128xf32, #tpu.memory_space<vmem>>, vector<8x128xf32>
    %c0_1 = arith.constant 0 : index
    %c0_2 = arith.constant 0 : index
    %1 = vector.load %arg2[%c0_1, %c0_2] : memref<8x128xf32, #tpu.memory_space<vmem>>, vector<8x128xf32>
    %cst = arith.constant 0.000000e+00 : f32
    %2 = vector.broadcast %cst : f32 to vector<8x128xf32>
    %3 = arith.maximumf %0, %2 : vector<8x128xf32>
    %4 = arith.mulf %0, %1 : vector<8x128xf32>
    %5 = arith.subf %3, %4 : vector<8x128xf32>
    %6 = math.absf %0 : vector<8x128xf32>
    %cst_3 = arith.constant 0.000000e+00 : f32
    %7 = vector.broadcast %cst_3 : f32 to vector<8x128xf32>
    %8 = arith.subf %7, %6 : vector<8x128xf32>
    %9 = math.exp %8 : vector<8x128xf32>
    %10 = math.log1p %9 : vector<8x128xf32>
    %11 = arith.addf %5, %10 : vector<8x128xf32>
    %12 = tpu.iota {dimensions = array<i32: 0>} : vector<8x128xi32>
    %13 = tpu.iota {dimensions = array<i32: 1>} : vector<8x128xi32>
    %c8_i32 = arith.constant 8 : i32
    %14 = arith.muli %arg0, %c8_i32 : i32
    %15 = vector.broadcast %14 : i32 to vector<8x128xi32>
    %16 = arith.addi %15, %12 : vector<8x128xi32>
    %c128_i32 = arith.constant 128 : i32
    %17 = vector.broadcast %c128_i32 : i32 to vector<8x128xi32>
    %18 = arith.muli %16, %17 : vector<8x128xi32>
    %19 = arith.addi %18, %13 : vector<8x128xi32>
    %c56_i32 = arith.constant 56 : i32
    %20 = vector.broadcast %c56_i32 : i32 to vector<8x128xi32>
    %21 = arith.cmpi slt, %19, %20 : vector<8x128xi32>
    %cst_4 = arith.constant 0.000000e+00 : f32
    %22 = vector.broadcast %cst_4 : f32 to vector<8x128xf32>
    %23 = arith.select %21, %11, %22 : vector<8x128xi1>, vector<8x128xf32>
    %24 = vector.shape_cast %23 : vector<8x128xf32> to vector<1x8x128xf32>
    %cst_5 = arith.constant dense<0.000000e+00> : vector<1xf32>
    %25 = vector.multi_reduction <add>, %24, %cst_5 [1, 2] : vector<1x8x128xf32> to vector<1xf32>
    %26 = vector.shape_cast %25 : vector<1xf32> to vector<1x1x1xf32>
    %27 = vector.extract %26[0, 0, 0] : f32 from vector<1x1x1xf32>
    %28 = vector.broadcast %27 : f32 to vector<1x1xf32>
    %c0_6 = arith.constant 0 : index
    %c0_7 = arith.constant 0 : index
    %29 = vector.load %arg3[%c0_6, %c0_7] : memref<1x1xf32, #tpu.memory_space<vmem>>, vector<1x1xf32>
    tpu.vector_store %arg3[%c0_6, %c0_7], %28 {strides = array<i32>} : memref<1x1xf32, #tpu.memory_space<vmem>>, vector<1x1xf32>,
    return
  }
  func.func @transform_0(%arg0: i32) -> (i32, i32) {
    %c0_i32 = arith.constant 0 : i32
    %c0_i32_0 = arith.constant 0 : i32
    return %arg0, %c0_i32 : i32, i32
  }
  func.func @transform_1(%arg0: i32) -> (i32, i32) {
    %c0_i32 = arith.constant 0 : i32
    %c0_i32_0 = arith.constant 0 : i32
    return %arg0, %c0_i32 : i32, i32
  }
  func.func @transform_2(%arg0: i32) -> (i32, i32) {
    %c0_i32 = arith.constant 0 : i32
    %c0_i32_0 = arith.constant 0 : i32
    return %arg0, %c0_i32 : i32, i32
  }
}

</mosaic_0001>

<llo_original>
// kernel: tpu_custom_call.1
$region0: #{tpu_custom_call.1}
  #allocation0 [shape = 'u32[]', space=smem, size = 0x4, offset = 0x4, fixed_abs, tag = 'smem constant byte address 0x4 - core index']
  #allocation1 [shape = 'u32[144,128]{1,0:T(1,128)}', space=vmem, size = 0x12000, scoped, tag = 'internal scratch']
  %s0 = inlined_call_operand.hbm [shape: f32[8,128], index: 0, kind: input, shape index: {}]
  %s1 = inlined_call_operand.hbm [shape: f32[8,128], index: 1, kind: input, shape index: {}]
  %s2 = inlined_call_operand.hbm [shape: f32[1,1], index: 2, kind: output, shape index: {}]
  %s3 = sld [smem:[#allocation0]]
  $region26: #{tpu_custom_call.1} parent=0
    _
  %s5 = ssub.s32 1, %s3
  %s6 = scalar_select 0, %s5, %s3
  $region1: #{tpu_custom_call.1} parent=0
    #allocation2 [shape = 'u8[4096]{0}', space=vmem, size = 0x1000, scoped, tag = 'input window, operand 0, single buffered']
    #allocation3 [shape = 's32[1]{0}', space=sflag, size = 0x4, scoped, tag = 'scoped memory for tpu_custom_call.1']
    #allocation4 [shape = 's32[1]{0}', space=sflag, size = 0x4, scoped, tag = 'scoped memory for tpu_custom_call.1']
    #allocation5 [shape = 'u8[4096]{0}', space=vmem, size = 0x1000, scoped, tag = 'input window, operand 1, single buffered']
    #allocation6 [shape = 's32[1]{0}', space=sflag, size = 0x4, scoped, tag = 'scoped memory for tpu_custom_call.1']
    #allocation7 [shape = 'u8[512]{0}', space=vmem, size = 0x400, scoped, tag = 'output window, operand 0, single buffered']
    %7 = vsyncpa [#allocation3], 0
    %8 = vsyncpa [#allocation6], 0
    %9 = vsyncpa [#allocation4], 0
    // Predicated region
    $region2: #{tpu_custom_call.1} parent=1 // pred_check
      _
    $region3: #{tpu_custom_call.1} parent=1 // pred_check_branch
      %11 = sbr.rel (0) target = $region5
    $region4: #{tpu_custom_call.1} parent=1 // pred_region
      %s13 = ssub.s32 128, 128
      %14 = vsyncadd [#allocation3], %s13
      %s16 = sshll.u32 [#allocation2], 4
      %s17 = int_to_ptr.vmem [resolvable:$true] %s16
      %19 = dma.hbm_to_vmem [thread:$0]  %s0, 128, %s17, [#allocation3]
    $region5: #{tpu_custom_call.1} parent=1 // pred_fallthru
      _
    // Predicated region
    $region6: #{tpu_custom_call.1} parent=1 // pred_check
      _
    $region7: #{tpu_custom_call.1} parent=1 // pred_check_branch
      %21 = sbr.rel (0) target = $region9
    $region8: #{tpu_custom_call.1} parent=1 // pred_region
      %s23 = ssub.s32 128, 128
      %24 = vsyncadd [#allocation6], %s23
      %s26 = sshll.u32 [#allocation5], 4
      %s27 = int_to_ptr.vmem [resolvable:$true] %s26
      %29 = dma.hbm_to_vmem [thread:$0]  %s1, 128, %s27, [#allocation6]
    $region9: #{tpu_custom_call.1} parent=1 // pred_fallthru
      _
    // Predicated region
    $region10: #{tpu_custom_call.1} parent=1 // pred_check
      _
    $region11: #{tpu_custom_call.1} parent=1 // pred_check_branch
      %31 = sbr.rel (0) target = $region13
    $region12: #{tpu_custom_call.1} parent=1 // pred_region
      %32 = dma.done [#allocation3], 128
    $region13: #{tpu_custom_call.1} parent=1 // pred_fallthru
      _
    // Predicated region
    $region14: #{tpu_custom_call.1} parent=1 // pred_check
      _
    $region15: #{tpu_custom_call.1} parent=1 // pred_check_branch
      %34 = sbr.rel (0) target = $region17
    $region16: #{tpu_custom_call.1} parent=1 // pred_region
      %35 = dma.done [#allocation6], 128
    $region17: #{tpu_custom_call.1} parent=1 // pred_fallthru
      _
    %v36 = vld [vmem:[#allocation2] sm:$0xff]
    %v37 = vld [vmem:[#allocation5] sm:$0xff]
    %v38 = vmax.f32 %v36, 0.0
    %v39 = vmul.f32 %v36, %v37
    %v40 = vsub.f32 %v38, %v39
    %v41 = vand.u32 2147483647, %v36
    %v42 = vsub.f32 0.0, %v41
    %v43 = vmul.f32 %v42, 1.442695
    %v44 = vpow.pop %v43
    %v45 = vadd.f32 %v44, 1.0
    %v46 = vlog2.pop %v45
    %v47 = vmul.f32 %v46, 0.6931472
    %v48 = vmul.f32 -0.5, %v44
    %v49 = vadd.f32 %v48, 1.0
    %v50 = vmul.f32 %v49, %v44
    %v51 = vand.u32 2147483647, %v44
    %vm52 = vcmp.lt.f32.partialorder %v51, 0.0004427343
    %v53 = vsel %vm52, %v50, %v47
    %v54 = vadd.f32 %v40, %v53
    %v55 = vlaneseq
    %v56 = vshrl.u32 %v55, 7
    %v57 = vlaneseq
    %v58 = vand.u32 %v57, 127
    %s59 = smul.u32 0, 8
    %v60 = vstv %s59
    %v61 = vadd.s32 %v60, %v56
    %v62 = vmul.u32 %v61, 128
    %v63 = vadd.s32 %v62, %v58
    %vm64 = vcmp.lt.s32.totalorder %v63, 56
    %v65 = vsel %vm64, %v54, 0.0
    %66 = vadd.xlane.f32.xlu0 %v65
    %v67 = vpop.xlane.xlu0 %66
    %v68 = vrot.slane %v67, 4
    %v69 = vadd.f32 %v67, %v68
    %v70 = vrot.slane %v69, 2
    %v71 = vadd.f32 %v69, %v70
    %v72 = vrot.slane %v71, 1
    %v73 = vadd.f32 %v71, %v72
    %s74 = vtos %v73
    %v75 = vstv %s74
    %vm76 = vcmask 0
    %77 = vst.msk [vmem:[#allocation7] sm:$0x1] %vm76, %v75
    // Predicated region
    $region18: #{tpu_custom_call.1} parent=1 // pred_check
      _
    $region19: #{tpu_custom_call.1} parent=1 // pred_check_branch
      %79 = sbr.rel (0) target = $region21
    $region20: #{tpu_custom_call.1} parent=1 // pred_region
      %s81 = ssub.s32 16, 16
      %82 = vsyncadd [#allocation4], %s81
      %s84 = sshll.u32 [#allocation7], 4
      %s85 = int_to_ptr.vmem [resolvable:$true] %s84
      %87 = dma.vmem_to_hbm [thread:$0]  %s85, 16, %s2, [#allocation4]
    $region21: #{tpu_custom_call.1} parent=1 // pred_fallthru
      _
    // Predicated region
    $region22: #{tpu_custom_call.1} parent=1 // pred_check
      _
    $region23: #{tpu_custom_call.1} parent=1 // pred_check_branch
      %89 = sbr.rel (0) target = $region25
    $region24: #{tpu_custom_call.1} parent=1 // pred_region
      %90 = dma.done [#allocation4], 16
    $region25: #{tpu_custom_call.1} parent=1 // pred_fallthru
      _
    %91 = vsyncpa [#allocation3], 1
    %92 = vsyncpa [#allocation6], 1
    %93 = vsyncpa [#allocation4], 1

</llo_original>
